<compile_context>
chip_gen: v5e
topology: v5e:2x2
jax: 0.10.0
libtpu: 0.0.40
codegen_flags: <defaults>
</compile_context>

<pallas_src>
import functools

import jax
import jax.numpy as jnp
from jax import lax
from jax.experimental import pallas as pl
from jax.experimental.pallas import tpu as pltpu

LANE = 128
BATCH_PAD = 16            # bf16 sublane tile -> pad batch to a multiple of 16


def _round_up(x, m):
    return ((x + m - 1) // m) * m


def _clamp_vmem(est_bytes):
    # 2x margin + 4 MiB headroom, floor at 16 MiB (<= default everywhere),
    # cap well under the smallest physical VMEM (v7x: 64 MiB per TensorCore).
    return int(min(max(2 * est_bytes + (4 << 20), 16 << 20), 56 << 20))


def _choose_time_chunk(T, Bp, Hp, target_bytes=6 << 20):
    # VMEM held per recurrence time step:
    #   gate chunks (2 dirs x 3Hp, bf16, double-buffered)
    # + hidden-out chunks (2 dirs x Hp, bf16, double-buffered)
    per_t = (2 * 3 * Hp + 2 * Hp) * Bp * 2 * 2
    tt = max(1, min(T, target_bytes // per_t))
    while T % tt:            # keep semantics exact: Tt must divide T
        tt -= 1
    return int(tt)


# ----------------------------------------------------------------------------
# Kernel 1: fused input pre-projection for BOTH directions of one GRU layer.
#   gates_x = x @ [Wi_fwd | Wi_bwd] + b   (b already contains b_i + b_hr/b_hz)
# Output is bf16 (largest intermediate tensor -> halve HBM traffic).
# ----------------------------------------------------------------------------
def _in_proj_kernel(x_ref, w_ref, b_ref, o_ref):
    o_ref[...] = (
        jnp.dot(x_ref[...], w_ref[...], preferred_element_type=jnp.float32)
        + b_ref[...]
    ).astype(o_ref.dtype)


def input_projection(x_rows, w_i, b_i, *, row_tile=512):
    rows, k_in = x_rows.shape
    gp = w_i.shape[-1]
    rt = min(rows, row_tile)
    while rows % rt:                     # rows is a multiple of 16
        rt -= BATCH_PAD
    est = 2 * (rt * k_in * 2 + w_i.size * 2 + b_i.size * 4 + rt * gp * 2)
    return pl.pallas_call(
        _in_proj_kernel,
        out_shape=jax.ShapeDtypeStruct((rows, gp), jnp.bfloat16),
        grid=(rows // rt,),
        in_specs=[
            pl.BlockSpec((rt, k_in), lambda i: (i, 0)),
            pl.BlockSpec(w_i.shape, lambda i: (0, 0)),      # weights resident
            pl.BlockSpec(b_i.shape, lambda i: (0, 0)),
        ],
        out_specs=pl.BlockSpec((rt, gp), lambda i: (i, 0)),
        compiler_params=pltpu.CompilerParams(
            dimension_semantics=("parallel",),
            vmem_limit_bytes=_clamp_vmem(est)),
    )(x_rows, w_i, b_i)


# Deeper layers consume the recurrence's two separate (fwd, bwd) hidden outputs
# without ever concatenating them in HBM: split W_i by input row-block.
def _in_proj_pair_kernel(xf_ref, xb_ref, w_ref, b_ref, o_ref):
    acc = jnp.dot(xf_ref[...], w_ref[0], preferred_element_type=jnp.float32)
    acc = acc + jnp.dot(xb_ref[...], w_ref[1], preferred_element_type=jnp.float32)
    o_ref[...] = (acc + b_ref[...]).astype(o_ref.dtype)


def input_projection_pair(xf_rows, xb_rows, w_i, b_i, *, row_tile=512):
    rows, hp = xf_rows.shape
    gp = w_i.shape[-1]
    rt = min(rows, row_tile)
    while rows % rt:
        rt -= BATCH_PAD
    est = 2 * (2 * rt * hp * 2 + w_i.size * 2 + b_i.size * 4 + rt * gp * 2)
    return pl.pallas_call(
        _in_proj_pair_kernel,
        out_shape=jax.ShapeDtypeStruct((rows, gp), jnp.bfloat16),
        grid=(rows // rt,),
        in_specs=[
            pl.BlockSpec((rt, hp), lambda i: (i, 0)),
            pl.BlockSpec((rt, hp), lambda i: (i, 0)),
            pl.BlockSpec(w_i.shape, lambda i: (0, 0, 0)),
            pl.BlockSpec(b_i.shape, lambda i: (0, 0)),
        ],
        out_specs=pl.BlockSpec((rt, gp), lambda i: (i, 0)),
        compiler_params=pltpu.CompilerParams(
            dimension_semantics=("parallel",),
            vmem_limit_bytes=_clamp_vmem(est)),
    )(xf_rows, xb_rows, w_i, b_i)


# ----------------------------------------------------------------------------
# Kernel 2: time-chunked bidirectional GRU recurrence.
# PyTorch nn.GRU gate math (b_hr, b_hz already folded into the x-projection):
#   r = sigmoid(gx_r + h W_hr)
#   z = sigmoid(gx_z + h W_hz)
#   n = tanh  (gx_n + r * (h W_hn + b_hn))
#   h' = (1 - z) * n + z * h
# Both directions are advanced per step (independent chains -> latency hiding).
# ----------------------------------------------------------------------------
def _gru_pair_step(gxf, gxb, hf, hb, wh_ref, bhn_f, bhn_b, hp):
    ghf = jnp.dot(hf.astype(jnp.bfloat16), wh_ref[0],
                  preferred_element_type=jnp.float32)
    ghb = jnp.dot(hb.astype(jnp.bfloat16), wh_ref[1],
                  preferred_element_type=jnp.float32)
    rf = jax.nn.sigmoid(gxf[:, :hp] + ghf[:, :hp])
    rb = jax.nn.sigmoid(gxb[:, :hp] + ghb[:, :hp])
    zf = jax.nn.sigmoid(gxf[:, hp:2 * hp] + ghf[:, hp:2 * hp])
    zb = jax.nn.sigmoid(gxb[:, hp:2 * hp] + ghb[:, hp:2 * hp])
    nf = jnp.tanh(gxf[:, 2 * hp:] + rf * (ghf[:, 2 * hp:] + bhn_f))
    nb = jnp.tanh(gxb[:, 2 * hp:] + rb * (ghb[:, 2 * hp:] + bhn_b))
    hf_new = (1.0 - zf) * nf + zf * hf
    hb_new = (1.0 - zb) * nb + zb * hb
    return hf_new, hb_new


def _bigru_kernel(gxf_ref, gxb_ref, wh_ref, bhn_ref,
                  outf_ref, outb_ref, hf_ref, hb_ref, *, tt, hp):
    c = pl.program_id(0)

    @pl.when(c == 0)
    def _():
        hf_ref[...] = jnp.zeros_like(hf_ref)
        hb_ref[...] = jnp.zeros_like(hb_ref)

    bp = hf_ref.shape[0]
    # hoist the (1, Hp) -> (Bp, Hp) bias broadcast out of the serial time loop
    bhn_f = jnp.broadcast_to(bhn_ref[0], (bp, hp))
    bhn_b = jnp.broadcast_to(bhn_ref[1], (bp, hp))

    def step(s, carry):
        sb = tt - 1 - s                      # backward chain walks chunk in reverse
        hf_new, hb_new = _gru_pair_step(gxf_ref[s], gxb_ref[sb],
                                        hf_ref[...], hb_ref[...],
                                        wh_ref, bhn_f, bhn_b, hp)
        hf_ref[...] = hf_new
        hb_ref[...] = hb_new
        outf_ref[s] = hf_new.astype(outf_ref.dtype)
        outb_ref[sb] = hb_new.astype(outb_ref.dtype)
        return carry

    lax.fori_loop(0, tt, step, 0, unroll=2)


def bigru_layer(gates, w_h, b_hn, *, time_chunk):
    """gates: (T, Bp, 6Hp) bf16.  Returns (out_fwd, out_bwd), each (T, Bp, Hp) bf16."""
    T, Bp, _ = gates.shape
    Hp = w_h.shape[1]
    tt = time_chunk
    nc = T // tt
    est = (2 * 2 * tt * Bp * 3 * Hp * 2      # gate chunks (fwd+bwd), double-buffered
           + 2 * w_h.size * 2                # resident W_h
           + 2 * b_hn.size * 4
           + 2 * 2 * tt * Bp * Hp * 2        # output chunks, double-buffered
           + 2 * Bp * Hp * 4)                # h scratch
    kernel = functools.partial(_bigru_kernel, tt=tt, hp=Hp)
    return pl.pallas_call(
        kernel,
        out_shape=(jax.ShapeDtypeStruct((T, Bp, Hp), jnp.bfloat16),
                   jax.ShapeDtypeStruct((T, Bp, Hp), jnp.bfloat16)),
        grid=(nc,),
        in_specs=[
            pl.BlockSpec((tt, Bp, 3 * Hp), lambda c: (c, 0, 0)),           # fwd gates
            pl.BlockSpec((tt, Bp, 3 * Hp), lambda c: (nc - 1 - c, 0, 1)),  # bwd gates
            pl.BlockSpec(w_h.shape, lambda c: (0, 0, 0)),
            pl.BlockSpec(b_hn.shape, lambda c: (0, 0, 0)),
        ],
        out_specs=(pl.BlockSpec((tt, Bp, Hp), lambda c: (c, 0, 0)),
                   pl.BlockSpec((tt, Bp, Hp), lambda c: (nc - 1 - c, 0, 0))),
        scratch_shapes=[pltpu.VMEM((Bp, Hp), jnp.float32),
                        pltpu.VMEM((Bp, Hp), jnp.float32)],
        compiler_params=pltpu.CompilerParams(
            dimension_semantics=("arbitrary",),
            vmem_limit_bytes=_clamp_vmem(est)),
    )(gates, gates, w_h, b_hn)


# ----------------------------------------------------------------------------
# Kernel 2b: last layer = recurrence + FUSED max-pool over time + tanh + linear.
# The hidden sequence never goes to HBM; only (Bp, Cp) logits are written.
# ----------------------------------------------------------------------------
def _bigru_head_kernel(gxf_ref, gxb_ref, wh_ref, bhn_ref, lw_ref, lb_ref,
                       logit_ref, hf_ref, hb_ref, mx_ref, *, tt, hp):
    c = pl.program_id(0)

    @pl.when(c == 0)
    def _():
        hf_ref[...] = jnp.zeros_like(hf_ref)
        hb_ref[...] = jnp.zeros_like(hb_ref)
        mx_ref[...] = jnp.full_like(mx_ref, -jnp.inf)

    bp = hf_ref.shape[0]
    bhn_f = jnp.broadcast_to(bhn_ref[0], (bp, hp))
    bhn_b = jnp.broadcast_to(bhn_ref[1], (bp, hp))

    def step(s, carry):
        sb = tt - 1 - s
        hf_new, hb_new = _gru_pair_step(gxf_ref[s], gxb_ref[sb],
                                        hf_ref[...], hb_ref[...],
                                        wh_ref, bhn_f, bhn_b, hp)
        hf_ref[...] = hf_new
        hb_ref[...] = hb_new
        # running max-pool over time (order independent)
        mx_ref[0] = jnp.maximum(mx_ref[0], hf_new)
        mx_ref[1] = jnp.maximum(mx_ref[1], hb_new)
        return carry

    lax.fori_loop(0, tt, step, 0, unroll=2)

    @pl.when(c == pl.num_programs(0) - 1)
    def _():
        act_f = jnp.tanh(mx_ref[0]).astype(jnp.bfloat16)
        act_b = jnp.tanh(mx_ref[1]).astype(jnp.bfloat16)
        logits = jnp.dot(act_f, lw_ref[pl.ds(0, hp), :],
                         preferred_element_type=jnp.float32)
        logits = logits + jnp.dot(act_b, lw_ref[pl.ds(hp, hp), :],
                                  preferred_element_type=jnp.float32)
        logit_ref[...] = logits + lb_ref[...]


def bigru_head_layer(gates, w_h, b_hn, lin_w, lin_b, *, time_chunk):
    T, Bp, _ = gates.shape
    Hp = w_h.shape[1]
    Cp = lin_w.shape[1]
    tt = time_chunk
    nc = T // tt
    est = (2 * 2 * tt * Bp * 3 * Hp * 2
           + 2 * w_h.size * 2
           + 2 * b_hn.size * 4
           + 2 * lin_w.size * 2 + 2 * lin_b.size * 4
           + 2 * Bp * Cp * 4                 # logits output
           + 4 * Bp * Hp * 4)                # hf, hb, mx scratch
    kernel = functools.partial(_bigru_head_kernel, tt=tt, hp=Hp)
    return pl.pallas_call(
        kernel,
        out_shape=jax.ShapeDtypeStruct((Bp, Cp), jnp.float32),
        grid=(nc,),
        in_specs=[
            pl.BlockSpec((tt, Bp, 3 * Hp), lambda c: (c, 0, 0)),
            pl.BlockSpec((tt, Bp, 3 * Hp), lambda c: (nc - 1 - c, 0, 1)),
            pl.BlockSpec(w_h.shape, lambda c: (0, 0, 0)),
            pl.BlockSpec(b_hn.shape, lambda c: (0, 0, 0)),
            pl.BlockSpec(lin_w.shape, lambda c: (0, 0)),
            pl.BlockSpec(lin_b.shape, lambda c: (0, 0)),
        ],
        out_specs=pl.BlockSpec((Bp, Cp), lambda c: (0, 0)),
        scratch_shapes=[pltpu.VMEM((Bp, Hp), jnp.float32),
                        pltpu.VMEM((Bp, Hp), jnp.float32),
                        pltpu.VMEM((2, Bp, Hp), jnp.float32)],
        compiler_params=pltpu.CompilerParams(
            dimension_semantics=("arbitrary",),
            vmem_limit_bytes=_clamp_vmem(est)),
    )(gates, gates, w_h, b_hn, lin_w, lin_b)


# ----------------------------------------------------------------------------
# Model wrapper (time-major end to end)
# ----------------------------------------------------------------------------
def gru_model_forward(word, sentence_length, params):
    # The PyTorch module does not mask by sentence_length (no pack_padded),
    # so it is accepted and ignored here as well.
    del sentence_length
    B, T = word.shape
    Bp = _round_up(max(B, BATCH_PAD), BATCH_PAD)
    pad_id = params["padding_id"]

    word_p = jnp.full((Bp, T), pad_id, dtype=word.dtype).at[:B].set(word)

    # time-major embedding lookup; table stored in bf16 -> no separate cast pass
    x = params["embed"][word_p.T]                          # (T, Bp, Dp) bf16
    # dropout_embed / dropout: identity at inference.

    layers = params["gru_layers"]
    Hp = layers[0]["w_h"].shape[1]
    n_layers = len(layers)
    tt = _choose_time_chunk(T, Bp, Hp)

    pair = None
    logits_p = None
    for li, lyr in enumerate(layers):
        if li == 0:
            Tn, Bn, K = x.shape
            gates = input_projection(x.reshape(Tn * Bn, K), lyr["w_i"], lyr["b_i"])
        else:
            hf, hb = pair
            gates = input_projection_pair(hf.reshape(T * Bp, Hp),
                                          hb.reshape(T * Bp, Hp),
                                          lyr["w_i"], lyr["b_i"])
        gates = gates.reshape(T, Bp, 6 * Hp)               # (T, Bp, 6Hp) bf16
        if li == n_layers - 1:
            logits_p = bigru_head_layer(gates, lyr["w_h"], lyr["b_hn"],
                                        params["lin_w"], params["lin_b"],
                                        time_chunk=tt)     # (Bp, Cp) f32
        else:
            pair = bigru_layer(gates, lyr["w_h"], lyr["b_hn"], time_chunk=tt)

    return logits_p[:B, :params["label_num"]]


# ----------------------------------------------------------------------------
# Deterministic, pre-padded parameter init (mirrors module __init__ shapes).
# Real weights live in the unpadded sub-blocks; all padded rows/cols are zero,
# which keeps padded hidden lanes at 0 through the recurrence.
# b_hr/b_hz are folded into b_i; only b_hn is kept separate (multiplied by r).
# ----------------------------------------------------------------------------
def init_params(key, V, D, H, C, num_layers, padding_id):
    Dp = _round_up(D, LANE)
    Hp = _round_up(H, LANE)
    Cp = _round_up(C, LANE)

    def nxt():
        nonlocal key
        key, sub = jax.random.split(key)
        return sub

    def unif(shape):
        return jax.random.uniform(nxt(), shape, jnp.float32, -0.1, 0.1)

    embed = jnp.zeros((V, Dp), jnp.float32).at[:, :D].set(unif((V, D)))
    embed = embed.at[padding_id].set(0.0)                  # padding_idx row

    gru_layers = []
    for layer in range(num_layers):
        if layer == 0:
            w_i = jnp.zeros((Dp, 6 * Hp), jnp.float32)     # [fwd 3Hp | bwd 3Hp]
        else:
            w_i = jnp.zeros((2, Hp, 6 * Hp), jnp.float32)  # row-block per input dir
        b_i = jnp.zeros((1, 6 * Hp), jnp.float32)
        w_h = jnp.zeros((2, Hp, 3 * Hp), jnp.float32)      # W_hr|W_hz|W_hn per dir
        b_hn = jnp.zeros((2, 1, Hp), jnp.float32)
        for d in range(2):
            for g in range(3):                             # r, z, n
                col = d * 3 * Hp + g * Hp
                if layer == 0:
                    w_i = w_i.at[:D, col:col + H].set(unif((D, H)))
                else:
                    w_i = w_i.at[0, :H, col:col + H].set(unif((H, H)))  # fwd-in feats
                    w_i = w_i.at[1, :H, col:col + H].set(unif((H, H)))  # bwd-in feats
                bi = unif((H,))
                bh = unif((H,))
                if g < 2:                                  # fold b_hr / b_hz into b_i
                    b_i = b_i.at[0, col:col + H].set(bi + bh)
                else:
                    b_i = b_i.at[0, col:col + H].set(bi)
                    b_hn = b_hn.at[d, 0, :H].set(bh)
                w_h = w_h.at[d, :H, g * Hp:g * Hp + H].set(unif((H, H)))
        gru_layers.append({"w_i": w_i.astype(jnp.bfloat16), "b_i": b_i,
                           "w_h": w_h.astype(jnp.bfloat16), "b_hn": b_hn})

    lin_w = jnp.zeros((2 * Hp, Cp), jnp.float32)
    lin_w = lin_w.at[:H, :C].set(unif((H, C)))             # fwd half
    lin_w = lin_w.at[Hp:Hp + H, :C].set(unif((H, C)))      # bwd half
    lin_b = jnp.zeros((1, Cp), jnp.float32)

    return {"embed": embed.astype(jnp.bfloat16), "gru_layers": gru_layers,
            "lin_w": lin_w.astype(jnp.bfloat16), "lin_b": lin_b,
            "padding_id": padding_id, "label_num": C}


# ----------------------------------------------------------------------------
# Pure-JAX f32 reference (same stored weights / layout) for a tolerance check.
# ----------------------------------------------------------------------------
def reference_forward(word, params):
    layers = params["gru_layers"]
    Hp = layers[0]["w_h"].shape[1]
    h_seq = params["embed"].astype(jnp.float32)[word]      # (B, T, Dp)
    for lyr in layers:
        w_i = lyr["w_i"].astype(jnp.float32)
        if w_i.ndim == 3:
            w_i = jnp.concatenate([w_i[0], w_i[1]], axis=0)
        b_i = lyr["b_i"][0]
        w_h = lyr["w_h"].astype(jnp.float32)
        b_hn = lyr["b_hn"]
        B, T, _ = h_seq.shape
        outs = []
        for d in range(2):
            gx_all = (h_seq @ w_i[:, d * 3 * Hp:(d + 1) * 3 * Hp]
                      + b_i[d * 3 * Hp:(d + 1) * 3 * Hp])
            h = jnp.zeros((B, Hp), jnp.float32)
            out_d = jnp.zeros((B, T, Hp), jnp.float32)
            t_order = range(T) if d == 0 else range(T - 1, -1, -1)
            for t in t_order:
                gx = gx_all[:, t]
                gh = h @ w_h[d]
                r = jax.nn.sigmoid(gx[:, :Hp] + gh[:, :Hp])
                z = jax.nn.sigmoid(gx[:, Hp:2 * Hp] + gh[:, Hp:2 * Hp])
                n = jnp.tanh(gx[:, 2 * Hp:] + r * (gh[:, 2 * Hp:] + b_hn[d, 0]))
                h = (1.0 - z) * n + z * h
                out_d = out_d.at[:, t].set(h)
            outs.append(out_d)
        h_seq = jnp.concatenate(outs, axis=-1)
    pooled = jnp.max(h_seq, axis=1)
    act = jnp.tanh(pooled)
    logits = act @ params["lin_w"].astype(jnp.float32) + params["lin_b"][0]
    return logits[:, :params["label_num"]]


if __name__ == "__main__":
    # Small config consistent with the module's __init__:
    V, D, H, C = 50, 32, 32, 5          # embed_num, embed_dim, lstm_hiddens, label_num
    num_layers = 2                      # lstm_layers (exercises both recurrence kernels)
    padding_id = 0
    B, T = 2, 8

    key = jax.random.PRNGKey(0)
    k_tok, k_par = jax.random.split(key)
    word = jax.random.randint(k_tok, (B, T), 0, V, dtype=jnp.int32)
    sentence_length = jnp.full((B,), T, dtype=jnp.int32)

    params = init_params(k_par, V, D, H, C, num_layers, padding_id)

    logits = gru_model_forward(word, sentence_length, params)
    jax.block_until_ready(logits)
    assert logits.shape == (B, C)
    assert bool(jnp.all(jnp.isfinite(logits)))

    ref = reference_forward(word, params)
    err = float(jnp.max(jnp.abs(logits - ref)))
    assert err < 5e-2, f"kernel vs f32 reference mismatch: max abs err {err}"
    print("KERNEL_OK")
</pallas_src>

<mosaic_0001>
module attributes {stable_mosaic.version = 11 : i64} {
  func.func @_in_proj_kernel(%arg0: i32, %arg1: memref<128x128xbf16, #tpu.memory_space<vmem>>, %arg2: memref<128x768xbf16, #tpu.memory_space<vmem>>, %arg3: memref<1x768xf32, #tpu.memory_space<vmem>>, %arg4: memref<128x768xbf16, #tpu.memory_space<vmem>>) attributes {dimension_semantics = [#tpu.dimension_semantics<parallel>], iteration_bounds = array<i64: 1>, scalar_prefetch = 0 : i64, scratch_operands = 0 : i64, tpu.core_type = #tpu.core_type<tc>, window_params = [{transform_indices = @transform_0, window_bounds = array<i64: 128, 128>}, {pipeline_mode = #tpu.pipeline_mode<synchronous>, transform_indices = @transform_1, window_bounds = array<i64: 128, 768>}, {pipeline_mode = #tpu.pipeline_mode<synchronous>, transform_indices = @transform_2, window_bounds = array<i64: 1, 768>}, {transform_indices = @transform_3, window_bounds = array<i64: 128, 768>}]} {
    %c0 = arith.constant 0 : index
    %c0_0 = arith.constant 0 : index
    %0 = vector.load %arg1[%c0, %c0_0] : memref<128x128xbf16, #tpu.memory_space<vmem>>, vector<128x128xbf16>
    %c0_1 = arith.constant 0 : index
    %c0_2 = arith.constant 0 : index
    %1 = vector.load %arg2[%c0_1, %c0_2] : memref<128x768xbf16, #tpu.memory_space<vmem>>, vector<128x768xbf16>
    %cst = arith.constant dense<0.000000e+00> : vector<128x768xf32>
    %2 = tpu.matmul %0, %1, %cst {dimension_numbers = #tpu.dot_dimension_numbers<[1], [0], [0], [1], [0, 0, 1, 1], [], []>} : vector<128x128xbf16>, vector<128x768xbf16>, vector<128x768xf32> -> vector<128x768xf32>
    %c0_3 = arith.constant 0 : index
    %c0_4 = arith.constant 0 : index
    %3 = vector.load %arg3[%c0_3, %c0_4] : memref<1x768xf32, #tpu.memory_space<vmem>>, vector<1x768xf32>
    %4 = vector.broadcast %3 : vector<1x768xf32> to vector<128x768xf32>
    %5 = arith.addf %2, %4 : vector<128x768xf32>
    %6 = arith.truncf %5 : vector<128x768xf32> to vector<128x768xbf16>
    %c0_5 = arith.constant 0 : index
    %c0_6 = arith.constant 0 : index
    %7 = vector.load %arg4[%c0_5, %c0_6] : memref<128x768xbf16, #tpu.memory_space<vmem>>, vector<128x768xbf16>
    tpu.vector_store %arg4[%c0_5, %c0_6], %6 {strides = array<i32>} : memref<128x768xbf16, #tpu.memory_space<vmem>>, vector<128x768xbf16>,
    return
  }
  func.func @transform_0(%arg0: i32) -> (i32, i32) {
    %c0_i32 = arith.constant 0 : i32
    %c0_i32_0 = arith.constant 0 : i32
    return %arg0, %c0_i32 : i32, i32
  }
  func.func @transform_1(%arg0: i32) -> (i32, i32) {
    %c0_i32 = arith.constant 0 : i32
    %c0_i32_0 = arith.constant 0 : i32
    %c0_i32_1 = arith.constant 0 : i32
    return %c0_i32, %c0_i32_0 : i32, i32
  }
  func.func @transform_2(%arg0: i32) -> (i32, i32) {
    %c0_i32 = arith.constant 0 : i32
    %c0_i32_0 = arith.constant 0 : i32
    %c0_i32_1 = arith.constant 0 : i32
    return %c0_i32, %c0_i32_0 : i32, i32
  }
  func.func @transform_3(%arg0: i32) -> (i32, i32) {
    %c0_i32 = arith.constant 0 : i32
    %c0_i32_0 = arith.constant 0 : i32
    return %arg0, %c0_i32 : i32, i32
  }
}

</mosaic_0001>

<llo_original>
// kernel: tpu_custom_call.1
$region0: #{tpu_custom_call.1}
  #allocation0 [shape = 'u32[]', space=smem, size = 0x4, offset = 0x4, fixed_abs, tag = 'smem constant byte address 0x4 - core index']
  #allocation1 [shape = 'u32[72,128]{1,0:T(1,128)}', space=vmem, size = 0x9000, scoped, tag = 'internal scratch']
  %s0 = inlined_call_operand.hbm [shape: bf16[128,128], index: 0, kind: input, shape index: {}]
  %s1 = inlined_call_operand.hbm [shape: bf16[128,768], index: 1, kind: input, shape index: {}]
  %s2 = inlined_call_operand.hbm [shape: f32[1,768], index: 2, kind: input, shape index: {}]
  %s3 = inlined_call_operand.hbm [shape: bf16[128,768], index: 3, kind: output, shape index: {}]
  %s4 = sld [smem:[#allocation0]]
  $region34: #{tpu_custom_call.1} parent=0
    _
  %s6 = ssub.s32 1, %s4
  %s7 = scalar_select 0, %s6, %s4
  $region1: #{tpu_custom_call.1} parent=0
    #allocation2 [shape = 'u8[32768]{0}', space=vmem, size = 0x8000, scoped, tag = 'input window, operand 0, single buffered']
    #allocation3 [shape = 's32[1]{0}', space=sflag, size = 0x4, scoped, tag = 'scoped memory for tpu_custom_call.1']
    #allocation4 [shape = 's32[1]{0}', space=sflag, size = 0x4, scoped, tag = 'scoped memory for tpu_custom_call.1']
    #allocation5 [shape = 'u8[196608]{0}', space=vmem, size = 0x30000, scoped, tag = 'input window, operand 1, single buffered']
    #allocation6 [shape = 's32[1]{0}', space=sflag, size = 0x4, scoped, tag = 'scoped memory for tpu_custom_call.1']
    #allocation7 [shape = 'u8[3072]{0}', space=vmem, size = 0xc00, scoped, tag = 'input window, operand 2, single buffered']
    #allocation8 [shape = 'u8[196608]{0}', space=vmem, size = 0x30000, scoped, tag = 'output window, operand 0, single buffered']
    %8 = vsyncpa [#allocation3], 0
    %9 = vsyncpa [#allocation6], 0
    %10 = vsyncpa [#allocation4], 0
    // Predicated region
    $region2: #{tpu_custom_call.1} parent=1 // pred_check
      _
    $region3: #{tpu_custom_call.1} parent=1 // pred_check_branch
      %12 = sbr.rel (0) target = $region5
    $region4: #{tpu_custom_call.1} parent=1 // pred_region
      %14 = vsyncadd [#allocation3], 0
      %s15 = sshll.u32 %s0, 4
      %s16 = int_to_ptr.hbm [resolvable:$true] %s15
      %s17 = sshll.u32 [#allocation2], 4
      %s18 = int_to_ptr.vmem [resolvable:$true] %s17
      %23 = dma.hbm_to_vmem [thread:$0]  %s16, 1024, %s18, [#allocation3], 64, 64, 4
    $region5: #{tpu_custom_call.1} parent=1 // pred_fallthru
      _
    // Predicated region
    $region6: #{tpu_custom_call.1} parent=1 // pred_check
      _
    $region7: #{tpu_custom_call.1} parent=1 // pred_check_branch
      %25 = sbr.rel (0) target = $region9
    $region8: #{tpu_custom_call.1} parent=1 // pred_region
      %27 = vsyncadd [#allocation6], 0
      %s28 = sshll.u32 %s1, 4
      %s29 = int_to_ptr.hbm [resolvable:$true] %s28
      %s30 = sshll.u32 [#allocation5], 4
      %s31 = int_to_ptr.vmem [resolvable:$true] %s30
      %36 = dma.hbm_to_vmem [thread:$0]  %s29, 6144, %s31, [#allocation6], 384, 384, 24
    $region9: #{tpu_custom_call.1} parent=1 // pred_fallthru
      _
    // Predicated region
    $region10: #{tpu_custom_call.1} parent=1 // pred_check
      _
    $region11: #{tpu_custom_call.1} parent=1 // pred_check_branch
      %38 = sbr.rel (0) target = $region13
    $region12: #{tpu_custom_call.1} parent=1 // pred_region
      %40 = vsyncadd [#allocation6], 0
      %s42 = sshll.u32 %s2, 4
      %s43 = int_to_ptr.hbm [resolvable:$true] %s42
      %s44 = sshll.u32 [#allocation7], 4
      %s45 = int_to_ptr.vmem [resolvable:$true] %s44
      %47 = dma.hbm_to_vmem [thread:$0]  %s43, 96, %s45, [#allocation6]
    $region13: #{tpu_custom_call.1} parent=1 // pred_fallthru
      _
    // Predicated region
    $region14: #{tpu_custom_call.1} parent=1 // pred_check
      _
    $region15: #{tpu_custom_call.1} parent=1 // pred_check_branch
      %49 = sbr.rel (0) target = $region17
    $region16: #{tpu_custom_call.1} parent=1 // pred_region
      %51 = dma.done [#allocation3], 1024
    $region17: #{tpu_custom_call.1} parent=1 // pred_fallthru
      _
    // Predicated region
    $region18: #{tpu_custom_call.1} parent=1 // pred_check
      _
    $region19: #{tpu_custom_call.1} parent=1 // pred_check_branch
      %53 = sbr.rel (0) target = $region21
    $region20: #{tpu_custom_call.1} parent=1 // pred_region
      %55 = dma.done [#allocation6], 6144
    $region21: #{tpu_custom_call.1} parent=1 // pred_fallthru
      _
    // Predicated region
    $region22: #{tpu_custom_call.1} parent=1 // pred_check
      _
    $region23: #{tpu_custom_call.1} parent=1 // pred_check_branch
      %57 = sbr.rel (0) target = $region25
    $region24: #{tpu_custom_call.1} parent=1 // pred_region
      %59 = dma.done [#allocation6], 96
    $region25: #{tpu_custom_call.1} parent=1 // pred_fallthru
      _
    %v60 = vld [vmem:[#allocation2] sm:$0xf]
    %v61 = vld [vmem:[#allocation2 + $0x4] sm:$0xf]
    %v62 = vld [vmem:[#allocation2 + $0x8] sm:$0xf]
    %v63 = vld [vmem:[#allocation2 + $0xc] sm:$0xf]
    %v64 = vld [vmem:[#allocation2 + $0x10] sm:$0xf]
    %v65 = vld [vmem:[#allocation2 + $0x14] sm:$0xf]
    %v66 = vld [vmem:[#allocation2 + $0x18] sm:$0xf]
    %v67 = vld [vmem:[#allocation2 + $0x1c] sm:$0xf]
    %v68 = vld [vmem:[#allocation2 + $0x20] sm:$0xf]
    %v69 = vld [vmem:[#allocation2 + $0x24] sm:$0xf]
    %v70 = vld [vmem:[#allocation2 + $0x28] sm:$0xf]
    %v71 = vld [vmem:[#allocation2 + $0x2c] sm:$0xf]
    %v72 = vld [vmem:[#allocation2 + $0x30] sm:$0xf]
    %v73 = vld [vmem:[#allocation2 + $0x34] sm:$0xf]
    %v74 = vld [vmem:[#allocation2 + $0x38] sm:$0xf]
    %v75 = vld [vmem:[#allocation2 + $0x3c] sm:$0xf]
    %v76 = vld [vmem:[#allocation5] sm:$0xff]
    %v77 = vld [vmem:[#allocation5 + $0x8] sm:$0xff]
    %v78 = vld [vmem:[#allocation5 + $0x10] sm:$0xff]
    %v79 = vld [vmem:[#allocation5 + $0x18] sm:$0xff]
    %v80 = vld [vmem:[#allocation5 + $0x20] sm:$0xff]
    %v81 = vld [vmem:[#allocation5 + $0x28] sm:$0xff]
    %v82 = vld [vmem:[#allocation5 + $0x30] sm:$0xff]
    %v83 = vld [vmem:[#allocation5 + $0x38] sm:$0xff]
    %v84 = vld [vmem:[#allocation5 + $0x40] sm:$0xff]
    %v85 = vld [vmem:[#allocation5 + $0x48] sm:$0xff]
    %v86 = vld [vmem:[#allocation5 + $0x50] sm:$0xff]
    %v87 = vld [vmem:[#allocation5 + $0x58] sm:$0xff]
    %v88 = vld [vmem:[#allocation5 + $0x60] sm:$0xff]
    %v89 = vld [vmem:[#allocation5 + $0x68] sm:$0xff]
    %v90 = vld [vmem:[#allocation5 + $0x70] sm:$0xff]
    %v91 = vld [vmem:[#allocation5 + $0x78] sm:$0xff]
    %v92 = vld [vmem:[#allocation5 + $0x80] sm:$0xff]
    %v93 = vld [vmem:[#allocation5 + $0x88] sm:$0xff]
    %v94 = vld [vmem:[#allocation5 + $0x90] sm:$0xff]
    %v95 = vld [vmem:[#allocation5 + $0x98] sm:$0xff]
    %v96 = vld [vmem:[#allocation5 + $0xa0] sm:$0xff]
    %v97 = vld [vmem:[#allocation5 + $0xa8] sm:$0xff]
    %v98 = vld [vmem:[#allocation5 + $0xb0] sm:$0xff]
    %v99 = vld [vmem:[#allocation5 + $0xb8] sm:$0xff]
    %v100 = vld [vmem:[#allocation5 + $0xc0] sm:$0xff]
    %v101 = vld [vmem:[#allocation5 + $0xc8] sm:$0xff]
    %v102 = vld [vmem:[#allocation5 + $0xd0] sm:$0xff]
    %v103 = vld [vmem:[#allocation5 + $0xd8] sm:$0xff]
    %v104 = vld [vmem:[#allocation5 + $0xe0] sm:$0xff]
    %v105 = vld [vmem:[#allocation5 + $0xe8] sm:$0xff]
    %v106 = vld [vmem:[#allocation5 + $0xf0] sm:$0xff]
    %v107 = vld [vmem:[#allocation5 + $0xf8] sm:$0xff]
    %v108 = vld [vmem:[#allocation5 + $0x100] sm:$0xff]
    %v109 = vld [vmem:[#allocation5 + $0x108] sm:$0xff]
    %v110 = vld [vmem:[#allocation5 + $0x110] sm:$0xff]
    %v111 = vld [vmem:[#allocation5 + $0x118] sm:$0xff]
    %v112 = vld [vmem:[#allocation5 + $0x120] sm:$0xff]
    %v113 = vld [vmem:[#allocation5 + $0x128] sm:$0xff]
    %v114 = vld [vmem:[#allocation5 + $0x130] sm:$0xff]
    %v115 = vld [vmem:[#allocation5 + $0x138] sm:$0xff]
    %v116 = vld [vmem:[#allocation5 + $0x140] sm:$0xff]
    %v117 = vld [vmem:[#allocation5 + $0x148] sm:$0xff]
    %v118 = vld [vmem:[#allocation5 + $0x150] sm:$0xff]
    %v119 = vld [vmem:[#allocation5 + $0x158] sm:$0xff]
    %v120 = vld [vmem:[#allocation5 + $0x160] sm:$0xff]
    %v121 = vld [vmem:[#allocation5 + $0x168] sm:$0xff]
    %v122 = vld [vmem:[#allocation5 + $0x170] sm:$0xff]
    %v123 = vld [vmem:[#allocation5 + $0x178] sm:$0xff]
    %v124 = vld [vmem:[#allocation7] sm:$0x3f]
    %v126 = vperm.slane %v124, 0
    %v127 = vperm.slane %v124, 1
    %v128 = vperm.slane %v124, 2
    %v129 = vperm.slane %v124, 3
    %v130 = vperm.slane %v124, 4
    %v131 = vperm.slane %v124, 5
    %v154 = vunpack.c.l.b16 %v60
    %v155 = vunpack.c.l.b16 %v61
    %v156 = vunpack.c.l.b16 %v62
    %v157 = vunpack.c.l.b16 %v63
    %v158 = vunpack.c.l.b16 %v64
    %v159 = vunpack.c.l.b16 %v65
    %v160 = vunpack.c.l.b16 %v66
    %v161 = vunpack.c.l.b16 %v67
    %v162 = vunpack.c.l.b16 %v68
    %v163 = vunpack.c.l.b16 %v69
    %v164 = vunpack.c.l.b16 %v70
    %v165 = vunpack.c.l.b16 %v71
    %v166 = vunpack.c.l.b16 %v72
    %v167 = vunpack.c.l.b16 %v73
    %v168 = vunpack.c.l.b16 %v74
    %v169 = vunpack.c.l.b16 %v75
    %v170 = vpack.c.b16 %v155, %v154
    %v171 = vpack.c.b16 %v157, %v156
    %v172 = vpack.c.b16 %v159, %v158
    %v173 = vpack.c.b16 %v161, %v160
    %v174 = vpack.c.b16 %v163, %v162
    %v175 = vpack.c.b16 %v165, %v164
    %v176 = vpack.c.b16 %v167, %v166
    %v177 = vpack.c.b16 %v169, %v168
    %v234 = vunpack.c.l.b16 %v76
    %v235 = vunpack.c.h.b16 %v76
    %v236 = vunpack.c.l.b16 %v77
    %v237 = vunpack.c.h.b16 %v77
    %v238 = vunpack.c.l.b16 %v78
    %v239 = vunpack.c.h.b16 %v78
    %v240 = vunpack.c.l.b16 %v79
    %v241 = vunpack.c.h.b16 %v79
    %v242 = vunpack.c.l.b16 %v80
    %v243 = vunpack.c.h.b16 %v80
    %v244 = vunpack.c.l.b16 %v81
    %v245 = vunpack.c.h.b16 %v81
    %v246 = vunpack.c.l.b16 %v82
    %v247 = vunpack.c.h.b16 %v82
    %v248 = vunpack.c.l.b16 %v83
    %v249 = vunpack.c.h.b16 %v83
    %v250 = vunpack.c.l.b16 %v84
    %v251 = vunpack.c.h.b16 %v84
    %v252 = vunpack.c.l.b16 %v85
    %v253 = vunpack.c.h.b16 %v85
    %v254 = vunpack.c.l.b16 %v86
    %v255 = vunpack.c.h.b16 %v86
    %v256 = vunpack.c.l.b16 %v87
    %v257 = vunpack.c.h.b16 %v87
    %v258 = vunpack.c.l.b16 %v88
    %v259 = vunpack.c.h.b16 %v88
    %v260 = vunpack.c.l.b16 %v89
    %v261 = vunpack.c.h.b16 %v89
    %v262 = vunpack.c.l.b16 %v90
    %v263 = vunpack.c.h.b16 %v90
    %v264 = vunpack.c.l.b16 %v91
    %v265 = vunpack.c.h.b16 %v91
    %v266 = vunpack.c.l.b16 %v92
    %v267 = vunpack.c.h.b16 %v92
    %v268 = vunpack.c.l.b16 %v93
    %v269 = vunpack.c.h.b16 %v93
    %v270 = vunpack.c.l.b16 %v94
    %v271 = vunpack.c.h.b16 %v94
    %v272 = vunpack.c.l.b16 %v95
    %v273 = vunpack.c.h.b16 %v95
    %v274 = vunpack.c.l.b16 %v96
    %v275 = vunpack.c.h.b16 %v96
    %v276 = vunpack.c.l.b16 %v97
    %v277 = vunpack.c.h.b16 %v97
    %v278 = vunpack.c.l.b16 %v98
    %v279 = vunpack.c.h.b16 %v98
    %v280 = vunpack.c.l.b16 %v99
    %v281 = vunpack.c.h.b16 %v99
    %v282 = vunpack.c.l.b16 %v100
    %v283 = vunpack.c.h.b16 %v100
    %v284 = vunpack.c.l.b16 %v101
    %v285 = vunpack.c.h.b16 %v101
    %v286 = vunpack.c.l.b16 %v102
    %v287 = vunpack.c.h.b16 %v102
    %v288 = vunpack.c.l.b16 %v103
    %v289 = vunpack.c.h.b16 %v103
    %v290 = vunpack.c.l.b16 %v104
    %v291 = vunpack.c.h.b16 %v104
    %v292 = vunpack.c.l.b16 %v105
    %v293 = vunpack.c.h.b16 %v105
    %v294 = vunpack.c.l.b16 %v106
    %v295 = vunpack.c.h.b16 %v106
    %v296 = vunpack.c.l.b16 %v107
    %v297 = vunpack.c.h.b16 %v107
    %v298 = vunpack.c.l.b16 %v108
    %v299 = vunpack.c.h.b16 %v108
    %v300 = vunpack.c.l.b16 %v109
    %v301 = vunpack.c.h.b16 %v109
    %v302 = vunpack.c.l.b16 %v110
    %v303 = vunpack.c.h.b16 %v110
    %v304 = vunpack.c.l.b16 %v111
    %v305 = vunpack.c.h.b16 %v111
    %v306 = vunpack.c.l.b16 %v112
    %v307 = vunpack.c.h.b16 %v112
    %v308 = vunpack.c.l.b16 %v113
    %v309 = vunpack.c.h.b16 %v113
    %v310 = vunpack.c.l.b16 %v114
    %v311 = vunpack.c.h.b16 %v114
    %v312 = vunpack.c.l.b16 %v115
    %v313 = vunpack.c.h.b16 %v115
    %v314 = vunpack.c.l.b16 %v116
    %v315 = vunpack.c.h.b16 %v116
    %v316 = vunpack.c.l.b16 %v117
    %v317 = vunpack.c.h.b16 %v117
    %v318 = vunpack.c.l.b16 %v118
    %v319 = vunpack.c.h.b16 %v118
    %v320 = vunpack.c.l.b16 %v119
    %v321 = vunpack.c.h.b16 %v119
    %v322 = vunpack.c.l.b16 %v120
    %v323 = vunpack.c.h.b16 %v120
    %v324 = vunpack.c.l.b16 %v121
    %v325 = vunpack.c.h.b16 %v121
    %v326 = vunpack.c.l.b16 %v122
    %v327 = vunpack.c.h.b16 %v122
    %v328 = vunpack.c.l.b16 %v123
    %v329 = vunpack.c.h.b16 %v123
    %v330 = vpack.c.b16 %v240, %v234
    %v331 = vpack.c.b16 %v241, %v235
    %v332 = vpack.c.b16 %v242, %v236
    %v333 = vpack.c.b16 %v243, %v237
    %v334 = vpack.c.b16 %v244, %v238
    %v335 = vpack.c.b16 %v245, %v239
    %v336 = vpack.c.b16 %v252, %v246
    %v337 = vpack.c.b16 %v253, %v247
    %v338 = vpack.c.b16 %v254, %v248
    %v339 = vpack.c.b16 %v255, %v249
    %v340 = vpack.c.b16 %v256, %v250
    %v341 = vpack.c.b16 %v257, %v251
    %v342 = vpack.c.b16 %v264, %v258
    %v343 = vpack.c.b16 %v265, %v259
    %v344 = vpack.c.b16 %v266, %v260
    %v345 = vpack.c.b16 %v267, %v261
    %v346 = vpack.c.b16 %v268, %v262
    %v347 = vpack.c.b16 %v269, %v263
    %v348 = vpack.c.b16 %v276, %v270
    %v349 = vpack.c.b16 %v277, %v271
    %v350 = vpack.c.b16 %v278, %v272
    %v351 = vpack.c.b16 %v279, %v273
    %v352 = vpack.c.b16 %v280, %v274
    %v353 = vpack.c.b16 %v281, %v275
    %v354 = vpack.c.b16 %v288, %v282
    %v355 = vpack.c.b16 %v289, %v283
    %v356 = vpack.c.b16 %v290, %v284
    %v357 = vpack.c.b16 %v291, %v285
    %v358 = vpack.c.b16 %v292, %v286
    %v359 = vpack.c.b16 %v293, %v287
    %v360 = vpack.c.b16 %v300, %v294
    %v361 = vpack.c.b16 %v301, %v295
    %v362 = vpack.c.b16 %v302, %v296
    %v363 = vpack.c.b16 %v303, %v297
    %v364 = vpack.c.b16 %v304, %v298
    %v365 = vpack.c.b16 %v305, %v299
    %v366 = vpack.c.b16 %v312, %v306
    %v367 = vpack.c.b16 %v313, %v307
    %v368 = vpack.c.b16 %v314, %v308
    %v369 = vpack.c.b16 %v315, %v309
    %v370 = vpack.c.b16 %v316, %v310
    %v371 = vpack.c.b16 %v317, %v311
    %v372 = vpack.c.b16 %v324, %v318
    %v373 = vpack.c.b16 %v325, %v319
    %v374 = vpack.c.b16 %v326, %v320
    %v375 = vpack.c.b16 %v327, %v321
    %v376 = vpack.c.b16 %v328, %v322
    %v377 = vpack.c.b16 %v329, %v323
    %426 = vmatpush.bf16.msra.mxu0 %v372
    %427 = vmatpush.bf16.msra.mxu0 %v366
    %428 = vmatpush.bf16.msra.mxu0 %v360
    %429 = vmatpush.bf16.msra.mxu0 %v354
    %430 = vmatpush.bf16.msra.mxu0 %v348
    %431 = vmatpush.bf16.msra.mxu0 %v342
    %432 = vmatpush.bf16.msra.mxu0 %v336
    %433 = vmatpush.bf16.msra.mxu0 %v330
    %434 = vmatmul.bf16.gmra.mxu0 %v170
    %v435 = vpop.f32.mrf.mxu0
    %v436 = vadd.f32 %v126, %v435
    %v437 = vpop.f32.mrf.mxu0
    %v438 = vadd.f32 %v126, %v437
    %439 = vmatmul.bf16.gmra.mxu0 %v171
    %v440 = vpop.f32.mrf.mxu0
    %v441 = vadd.f32 %v126, %v440
    %v442 = vpop.f32.mrf.mxu0
    %v443 = vadd.f32 %v126, %v442
    %444 = vmatmul.bf16.gmra.mxu0 %v172
    %v445 = vpop.f32.mrf.mxu0
    %v446 = vadd.f32 %v126, %v445
    %v447 = vpop.f32.mrf.mxu0
    %v448 = vadd.f32 %v126, %v447
    %449 = vmatmul.bf16.gmra.mxu0 %v173
    %v450 = vpop.f32.mrf.mxu0
    %v451 = vadd.f32 %v126, %v450
    %v452 = vpop.f32.mrf.mxu0
    %v453 = vadd.f32 %v126, %v452
    %454 = vmatmul.bf16.gmra.mxu0 %v174
    %v455 = vpop.f32.mrf.mxu0
    %v456 = vadd.f32 %v126, %v455
    %v457 = vpop.f32.mrf.mxu0
    %v458 = vadd.f32 %v126, %v457
    %459 = vmatmul.bf16.gmra.mxu0 %v175
    %v460 = vpop.f32.mrf.mxu0
    %v461 = vadd.f32 %v126, %v460
    %v462 = vpop.f32.mrf.mxu0
    %v463 = vadd.f32 %v126, %v462
    %464 = vmatmul.bf16.gmra.mxu0 %v176
    %v465 = vpop.f32.mrf.mxu0
    %v466 = vadd.f32 %v126, %v465
    %v467 = vpop.f32.mrf.mxu0
    %v468 = vadd.f32 %v126, %v467
    %469 = vmatmul.bf16.gmra.mxu0 %v177
    %v470 = vpop.f32.mrf.mxu0
    %v471 = vadd.f32 %v126, %v470
    %v472 = vpop.f32.mrf.mxu0
    %v473 = vadd.f32 %v126, %v472
    %474 = vdwg.mxu0
    %475 = vmatpush.bf16.msra.mxu0 %v373
    %476 = vmatpush.bf16.msra.mxu0 %v367
    %477 = vmatpush.bf16.msra.mxu0 %v361
    %478 = vmatpush.bf16.msra.mxu0 %v355
    %479 = vmatpush.bf16.msra.mxu0 %v349
    %480 = vmatpush.bf16.msra.mxu0 %v343
    %481 = vmatpush.bf16.msra.mxu0 %v337
    %482 = vmatpush.bf16.msra.mxu0 %v331
    %483 = vmatmul.bf16.gmra.mxu0 %v170
    %v484 = vpop.f32.mrf.mxu0
    %v485 = vadd.f32 %v127, %v484
    %v486 = vpop.f32.mrf.mxu0
    %v487 = vadd.f32 %v127, %v486
    %488 = vmatmul.bf16.gmra.mxu0 %v171
    %v489 = vpop.f32.mrf.mxu0
    %v490 = vadd.f32 %v127, %v489
    %v491 = vpop.f32.mrf.mxu0
    %v492 = vadd.f32 %v127, %v491
    %493 = vmatmul.bf16.gmra.mxu0 %v172
    %v494 = vpop.f32.mrf.mxu0
    %v495 = vadd.f32 %v127, %v494
    %v496 = vpop.f32.mrf.mxu0
    %v497 = vadd.f32 %v127, %v496
    %498 = vmatmul.bf16.gmra.mxu0 %v173
    %v499 = vpop.f32.mrf.mxu0
    %v500 = vadd.f32 %v127, %v499
    %v501 = vpop.f32.mrf.mxu0
    %v502 = vadd.f32 %v127, %v501
    %503 = vmatmul.bf16.gmra.mxu0 %v174
    %v504 = vpop.f32.mrf.mxu0
    %v505 = vadd.f32 %v127, %v504
    %v506 = vpop.f32.mrf.mxu0
    %v507 = vadd.f32 %v127, %v506
    %508 = vmatmul.bf16.gmra.mxu0 %v175
    %v509 = vpop.f32.mrf.mxu0
    %v510 = vadd.f32 %v127, %v509
    %v511 = vpop.f32.mrf.mxu0
    %v512 = vadd.f32 %v127, %v511
    %513 = vmatmul.bf16.gmra.mxu0 %v176
    %v514 = vpop.f32.mrf.mxu0
    %v515 = vadd.f32 %v127, %v514
    %v516 = vpop.f32.mrf.mxu0
    %v517 = vadd.f32 %v127, %v516
    %518 = vmatmul.bf16.gmra.mxu0 %v177
    %v519 = vpop.f32.mrf.mxu0
    %v520 = vadd.f32 %v127, %v519
    %v521 = vpop.f32.mrf.mxu0
    %v522 = vadd.f32 %v127, %v521
    %523 = vdwg.mxu0
    %524 = vmatpush.bf16.msra.mxu0 %v374
    %525 = vmatpush.bf16.msra.mxu0 %v368
    %526 = vmatpush.bf16.msra.mxu0 %v362
    %527 = vmatpush.bf16.msra.mxu0 %v356
    %528 = vmatpush.bf16.msra.mxu0 %v350
    %529 = vmatpush.bf16.msra.mxu0 %v344
    %530 = vmatpush.bf16.msra.mxu0 %v338
    %531 = vmatpush.bf16.msra.mxu0 %v332
    %532 = vmatmul.bf16.gmra.mxu0 %v170
    %v533 = vpop.f32.mrf.mxu0
    %v534 = vadd.f32 %v128, %v533
    %v535 = vpop.f32.mrf.mxu0
    %v536 = vadd.f32 %v128, %v535
    %537 = vmatmul.bf16.gmra.mxu0 %v171
    %v538 = vpop.f32.mrf.mxu0
    %v539 = vadd.f32 %v128, %v538
    %v540 = vpop.f32.mrf.mxu0
    %v541 = vadd.f32 %v128, %v540
    %542 = vmatmul.bf16.gmra.mxu0 %v172
    %v543 = vpop.f32.mrf.mxu0
    %v544 = vadd.f32 %v128, %v543
    %v545 = vpop.f32.mrf.mxu0
    %v546 = vadd.f32 %v128, %v545
    %547 = vmatmul.bf16.gmra.mxu0 %v173
    %v548 = vpop.f32.mrf.mxu0
    %v549 = vadd.f32 %v128, %v548
    %v550 = vpop.f32.mrf.mxu0
    %v551 = vadd.f32 %v128, %v550
    %552 = vmatmul.bf16.gmra.mxu0 %v174
    %v553 = vpop.f32.mrf.mxu0
    %v554 = vadd.f32 %v128, %v553
    %v555 = vpop.f32.mrf.mxu0
    %v556 = vadd.f32 %v128, %v555
    %557 = vmatmul.bf16.gmra.mxu0 %v175
    %v558 = vpop.f32.mrf.mxu0
    %v559 = vadd.f32 %v128, %v558
    %v560 = vpop.f32.mrf.mxu0
    %v561 = vadd.f32 %v128, %v560
    %562 = vmatmul.bf16.gmra.mxu0 %v176
    %v563 = vpop.f32.mrf.mxu0
    %v564 = vadd.f32 %v128, %v563
    %v565 = vpop.f32.mrf.mxu0
    %v566 = vadd.f32 %v128, %v565
    %567 = vmatmul.bf16.gmra.mxu0 %v177
    %v568 = vpop.f32.mrf.mxu0
    %v569 = vadd.f32 %v128, %v568
    %v570 = vpop.f32.mrf.mxu0
    %v571 = vadd.f32 %v128, %v570
    %572 = vdwg.mxu0
    %573 = vmatpush.bf16.msra.mxu0 %v375
    %574 = vmatpush.bf16.msra.mxu0 %v369
    %575 = vmatpush.bf16.msra.mxu0 %v363
    %576 = vmatpush.bf16.msra.mxu0 %v357
    %577 = vmatpush.bf16.msra.mxu0 %v351
    %578 = vmatpush.bf16.msra.mxu0 %v345
    %579 = vmatpush.bf16.msra.mxu0 %v339
    %580 = vmatpush.bf16.msra.mxu0 %v333
    %581 = vmatmul.bf16.gmra.mxu0 %v170
    %v582 = vpop.f32.mrf.mxu0
    %v583 = vadd.f32 %v129, %v582
    %v584 = vpop.f32.mrf.mxu0
    %v585 = vadd.f32 %v129, %v584
    %586 = vmatmul.bf16.gmra.mxu0 %v171
    %v587 = vpop.f32.mrf.mxu0
    %v588 = vadd.f32 %v129, %v587
    %v589 = vpop.f32.mrf.mxu0
    %v590 = vadd.f32 %v129, %v589
    %591 = vmatmul.bf16.gmra.mxu0 %v172
    %v592 = vpop.f32.mrf.mxu0
    %v593 = vadd.f32 %v129, %v592
    %v594 = vpop.f32.mrf.mxu0
    %v595 = vadd.f32 %v129, %v594
    %596 = vmatmul.bf16.gmra.mxu0 %v173
    %v597 = vpop.f32.mrf.mxu0
    %v598 = vadd.f32 %v129, %v597
    %v599 = vpop.f32.mrf.mxu0
    %v600 = vadd.f32 %v129, %v599
    %601 = vmatmul.bf16.gmra.mxu0 %v174
    %v602 = vpop.f32.mrf.mxu0
    %v603 = vadd.f32 %v129, %v602
    %v604 = vpop.f32.mrf.mxu0
    %v605 = vadd.f32 %v129, %v604
    %606 = vmatmul.bf16.gmra.mxu0 %v175
    %v607 = vpop.f32.mrf.mxu0
    %v608 = vadd.f32 %v129, %v607
    %v609 = vpop.f32.mrf.mxu0
    %v610 = vadd.f32 %v129, %v609
    %611 = vmatmul.bf16.gmra.mxu0 %v176
    %v612 = vpop.f32.mrf.mxu0
    %v613 = vadd.f32 %v129, %v612
    %v614 = vpop.f32.mrf.mxu0
    %v615 = vadd.f32 %v129, %v614
    %616 = vmatmul.bf16.gmra.mxu0 %v177
    %v617 = vpop.f32.mrf.mxu0
    %v618 = vadd.f32 %v129, %v617
    %v619 = vpop.f32.mrf.mxu0
    %v620 = vadd.f32 %v129, %v619
    %621 = vdwg.mxu0
    %622 = vmatpush.bf16.msra.mxu0 %v376
    %623 = vmatpush.bf16.msra.mxu0 %v370
    %624 = vmatpush.bf16.msra.mxu0 %v364
    %625 = vmatpush.bf16.msra.mxu0 %v358
    %626 = vmatpush.bf16.msra.mxu0 %v352
    %627 = vmatpush.bf16.msra.mxu0 %v346
    %628 = vmatpush.bf16.msra.mxu0 %v340
    %629 = vmatpush.bf16.msra.mxu0 %v334
    %630 = vmatmul.bf16.gmra.mxu0 %v170
    %v631 = vpop.f32.mrf.mxu0
    %v632 = vadd.f32 %v130, %v631
    %v633 = vpop.f32.mrf.mxu0
    %v634 = vadd.f32 %v130, %v633
    %635 = vmatmul.bf16.gmra.mxu0 %v171
    %v636 = vpop.f32.mrf.mxu0
    %v637 = vadd.f32 %v130, %v636
    %v638 = vpop.f32.mrf.mxu0
    %v639 = vadd.f32 %v130, %v638
    %640 = vmatmul.bf16.gmra.mxu0 %v172
    %v641 = vpop.f32.mrf.mxu0
    %v642 = vadd.f32 %v130, %v641
    %v643 = vpop.f32.mrf.mxu0
    %v644 = vadd.f32 %v130, %v643
    %645 = vmatmul.bf16.gmra.mxu0 %v173
    %v646 = vpop.f32.mrf.mxu0
    %v647 = vadd.f32 %v130, %v646
    %v648 = vpop.f32.mrf.mxu0
    %v649 = vadd.f32 %v130, %v648
    %650 = vmatmul.bf16.gmra.mxu0 %v174
    %v651 = vpop.f32.mrf.mxu0
    %v652 = vadd.f32 %v130, %v651
    %v653 = vpop.f32.mrf.mxu0
    %v654 = vadd.f32 %v130, %v653
    %655 = vmatmul.bf16.gmra.mxu0 %v175
    %v656 = vpop.f32.mrf.mxu0
    %v657 = vadd.f32 %v130, %v656
    %v658 = vpop.f32.mrf.mxu0
    %v659 = vadd.f32 %v130, %v658
    %660 = vmatmul.bf16.gmra.mxu0 %v176
    %v661 = vpop.f32.mrf.mxu0
    %v662 = vadd.f32 %v130, %v661
    %v663 = vpop.f32.mrf.mxu0
    %v664 = vadd.f32 %v130, %v663
    %665 = vmatmul.bf16.gmra.mxu0 %v177
    %v666 = vpop.f32.mrf.mxu0
    %v667 = vadd.f32 %v130, %v666
    %v668 = vpop.f32.mrf.mxu0
    %v669 = vadd.f32 %v130, %v668
    %670 = vdwg.mxu0
    %671 = vmatpush.bf16.msra.mxu0 %v377
    %672 = vmatpush.bf16.msra.mxu0 %v371
    %673 = vmatpush.bf16.msra.mxu0 %v365
    %674 = vmatpush.bf16.msra.mxu0 %v359
    %675 = vmatpush.bf16.msra.mxu0 %v353
    %676 = vmatpush.bf16.msra.mxu0 %v347
    %677 = vmatpush.bf16.msra.mxu0 %v341
    %678 = vmatpush.bf16.msra.mxu0 %v335
    %679 = vmatmul.bf16.gmra.mxu0 %v170
    %v680 = vpop.f32.mrf.mxu0
    %v681 = vadd.f32 %v131, %v680
    %v682 = vpop.f32.mrf.mxu0
    %v683 = vadd.f32 %v131, %v682
    %684 = vmatmul.bf16.gmra.mxu0 %v171
    %v685 = vpop.f32.mrf.mxu0
    %v686 = vadd.f32 %v131, %v685
    %v687 = vpop.f32.mrf.mxu0
    %v688 = vadd.f32 %v131, %v687
    %689 = vmatmul.bf16.gmra.mxu0 %v172
    %v690 = vpop.f32.mrf.mxu0
    %v691 = vadd.f32 %v131, %v690
    %v692 = vpop.f32.mrf.mxu0
    %v693 = vadd.f32 %v131, %v692
    %694 = vmatmul.bf16.gmra.mxu0 %v173
    %v695 = vpop.f32.mrf.mxu0
    %v696 = vadd.f32 %v131, %v695
    %v697 = vpop.f32.mrf.mxu0
    %v698 = vadd.f32 %v131, %v697
    %699 = vmatmul.bf16.gmra.mxu0 %v174
    %v700 = vpop.f32.mrf.mxu0
    %v701 = vadd.f32 %v131, %v700
    %v702 = vpop.f32.mrf.mxu0
    %v703 = vadd.f32 %v131, %v702
    %704 = vmatmul.bf16.gmra.mxu0 %v175
    %v705 = vpop.f32.mrf.mxu0
    %v706 = vadd.f32 %v131, %v705
    %v707 = vpop.f32.mrf.mxu0
    %v708 = vadd.f32 %v131, %v707
    %709 = vmatmul.bf16.gmra.mxu0 %v176
    %v710 = vpop.f32.mrf.mxu0
    %v711 = vadd.f32 %v131, %v710
    %v712 = vpop.f32.mrf.mxu0
    %v713 = vadd.f32 %v131, %v712
    %714 = vmatmul.bf16.gmra.mxu0 %v177
    %v715 = vpop.f32.mrf.mxu0
    %v716 = vadd.f32 %v131, %v715
    %v717 = vpop.f32.mrf.mxu0
    %v718 = vadd.f32 %v131, %v717
    %719 = vdwg.mxu0
    %v720 = vpack.c.bf16 %v485, %v436
    %v721 = vpack.c.bf16 %v583, %v534
    %v722 = vpack.c.bf16 %v681, %v632
    %v723 = vpack.c.bf16 %v487, %v438
    %v724 = vpack.c.bf16 %v585, %v536
    %v725 = vpack.c.bf16 %v683, %v634
    %v726 = vpack.c.bf16 %v490, %v441
    %v727 = vpack.c.bf16 %v588, %v539
    %v728 = vpack.c.bf16 %v686, %v637
    %v729 = vpack.c.bf16 %v492, %v443
    %v730 = vpack.c.bf16 %v590, %v541
    %v731 = vpack.c.bf16 %v688, %v639
    %v732 = vpack.c.bf16 %v495, %v446
    %v733 = vpack.c.bf16 %v593, %v544
    %v734 = vpack.c.bf16 %v691, %v642
    %v735 = vpack.c.bf16 %v497, %v448
    %v736 = vpack.c.bf16 %v595, %v546
    %v737 = vpack.c.bf16 %v693, %v644
    %v738 = vpack.c.bf16 %v500, %v451
    %v739 = vpack.c.bf16 %v598, %v549
    %v740 = vpack.c.bf16 %v696, %v647
    %v741 = vpack.c.bf16 %v502, %v453
    %v742 = vpack.c.bf16 %v600, %v551
    %v743 = vpack.c.bf16 %v698, %v649
    %v744 = vpack.c.bf16 %v505, %v456
    %v745 = vpack.c.bf16 %v603, %v554
    %v746 = vpack.c.bf16 %v701, %v652
    %v747 = vpack.c.bf16 %v507, %v458
    %v748 = vpack.c.bf16 %v605, %v556
    %v749 = vpack.c.bf16 %v703, %v654
    %v750 = vpack.c.bf16 %v510, %v461
    %v751 = vpack.c.bf16 %v608, %v559
    %v752 = vpack.c.bf16 %v706, %v657
    %v753 = vpack.c.bf16 %v512, %v463
    %v754 = vpack.c.bf16 %v610, %v561
    %v755 = vpack.c.bf16 %v708, %v659
    %v756 = vpack.c.bf16 %v515, %v466
    %v757 = vpack.c.bf16 %v613, %v564
    %v758 = vpack.c.bf16 %v711, %v662
    %v759 = vpack.c.bf16 %v517, %v468
    %v760 = vpack.c.bf16 %v615, %v566
    %v761 = vpack.c.bf16 %v713, %v664
    %v762 = vpack.c.bf16 %v520, %v471
    %v763 = vpack.c.bf16 %v618, %v569
    %v764 = vpack.c.bf16 %v716, %v667
    %v765 = vpack.c.bf16 %v522, %v473
    %v766 = vpack.c.bf16 %v620, %v571
    %v767 = vpack.c.bf16 %v718, %v669
    %768 = vst [vmem:[#allocation8] sm:$0xff] %v720
    %769 = vst [vmem:[#allocation8 + $0x8] sm:$0xff] %v721
    %770 = vst [vmem:[#allocation8 + $0x10] sm:$0xff] %v722
    %771 = vst [vmem:[#allocation8 + $0x18] sm:$0xff] %v723
    %772 = vst [vmem:[#allocation8 + $0x20] sm:$0xff] %v724
    %773 = vst [vmem:[#allocation8 + $0x28] sm:$0xff] %v725
    %774 = vst [vmem:[#allocation8 + $0x30] sm:$0xff] %v726
    %775 = vst [vmem:[#allocation8 + $0x38] sm:$0xff] %v727
    %776 = vst [vmem:[#allocation8 + $0x40] sm:$0xff] %v728
    %777 = vst [vmem:[#allocation8 + $0x48] sm:$0xff] %v729
    %778 = vst [vmem:[#allocation8 + $0x50] sm:$0xff] %v730
    %779 = vst [vmem:[#allocation8 + $0x58] sm:$0xff] %v731
    %780 = vst [vmem:[#allocation8 + $0x60] sm:$0xff] %v732
    %781 = vst [vmem:[#allocation8 + $0x68] sm:$0xff] %v733
    %782 = vst [vmem:[#allocation8 + $0x70] sm:$0xff] %v734
    %783 = vst [vmem:[#allocation8 + $0x78] sm:$0xff] %v735
    %784 = vst [vmem:[#allocation8 + $0x80] sm:$0xff] %v736
    %785 = vst [vmem:[#allocation8 + $0x88] sm:$0xff] %v737
    %786 = vst [vmem:[#allocation8 + $0x90] sm:$0xff] %v738
    %787 = vst [vmem:[#allocation8 + $0x98] sm:$0xff] %v739
    %788 = vst [vmem:[#allocation8 + $0xa0] sm:$0xff] %v740
    %789 = vst [vmem:[#allocation8 + $0xa8] sm:$0xff] %v741
    %790 = vst [vmem:[#allocation8 + $0xb0] sm:$0xff] %v742
    %791 = vst [vmem:[#allocation8 + $0xb8] sm:$0xff] %v743
    %792 = vst [vmem:[#allocation8 + $0xc0] sm:$0xff] %v744
    %793 = vst [vmem:[#allocation8 + $0xc8] sm:$0xff] %v745
    %794 = vst [vmem:[#allocation8 + $0xd0] sm:$0xff] %v746
    %795 = vst [vmem:[#allocation8 + $0xd8] sm:$0xff] %v747
    %796 = vst [vmem:[#allocation8 + $0xe0] sm:$0xff] %v748
    %797 = vst [vmem:[#allocation8 + $0xe8] sm:$0xff] %v749
    %798 = vst [vmem:[#allocation8 + $0xf0] sm:$0xff] %v750
    %799 = vst [vmem:[#allocation8 + $0xf8] sm:$0xff] %v751
    %800 = vst [vmem:[#allocation8 + $0x100] sm:$0xff] %v752
    %801 = vst [vmem:[#allocation8 + $0x108] sm:$0xff] %v753
    %802 = vst [vmem:[#allocation8 + $0x110] sm:$0xff] %v754
    %803 = vst [vmem:[#allocation8 + $0x118] sm:$0xff] %v755
    %804 = vst [vmem:[#allocation8 + $0x120] sm:$0xff] %v756
    %805 = vst [vmem:[#allocation8 + $0x128] sm:$0xff] %v757
    %806 = vst [vmem:[#allocation8 + $0x130] sm:$0xff] %v758
    %807 = vst [vmem:[#allocation8 + $0x138] sm:$0xff] %v759
    %808 = vst [vmem:[#allocation8 + $0x140] sm:$0xff] %v760
    %809 = vst [vmem:[#allocation8 + $0x148] sm:$0xff] %v761
    %810 = vst [vmem:[#allocation8 + $0x150] sm:$0xff] %v762
    %811 = vst [vmem:[#allocation8 + $0x158] sm:$0xff] %v763
    %812 = vst [vmem:[#allocation8 + $0x160] sm:$0xff] %v764
    %813 = vst [vmem:[#allocation8 + $0x168] sm:$0xff] %v765
    %814 = vst [vmem:[#allocation8 + $0x170] sm:$0xff] %v766
    %815 = vst [vmem:[#allocation8 + $0x178] sm:$0xff] %v767
    // Predicated region
    $region26: #{tpu_custom_call.1} parent=1 // pred_check
      _
    $region27: #{tpu_custom_call.1} parent=1 // pred_check_branch
      %817 = sbr.rel (0) target = $region29
    $region28: #{tpu_custom_call.1} parent=1 // pred_region
      %819 = vsyncadd [#allocation4], 0
      %s820 = sshll.u32 [#allocation8], 4
      %s821 = int_to_ptr.vmem [resolvable:$true] %s820
      %s822 = sshll.u32 %s3, 4
      %s823 = int_to_ptr.hbm [resolvable:$true] %s822
      %828 = dma.vmem_to_hbm [thread:$0]  %s821, 6144, %s823, [#allocation4], 384, 384, 24
    $region29: #{tpu_custom_call.1} parent=1 // pred_fallthru
      _
    // Predicated region
    $region30: #{tpu_custom_call.1} parent=1 // pred_check
      _
    $region31: #{tpu_custom_call.1} parent=1 // pred_check_branch
      %830 = sbr.rel (0) target = $region33
    $region32: #{tpu_custom_call.1} parent=1 // pred_region
      %832 = dma.done [#allocation4], 6144
    $region33: #{tpu_custom_call.1} parent=1 // pred_fallthru
      _
    %833 = vsyncpa [#allocation3], 1
    %834 = vsyncpa [#allocation6], 1
    %835 = vsyncpa [#allocation4], 1

</llo_original>
